<compile_context>
chip_gen: v6e
topology: v6e:2x2x1
jax: 0.10.0
libtpu: 0.0.40
codegen_flags: <defaults>
</compile_context>

<pallas_src>
import math

import numpy as np
import jax
import jax.numpy as jnp
from jax.experimental import pallas as pl
from jax.experimental.pallas import tpu as pltpu


def _round_up(x, m):
    return ((x + m - 1) // m) * m


def _select_tiles(n):
    """Pick (TN, CHUNK, N_pad, vmem_limit_bytes) per TPU generation."""
    kind = ""
    try:
        kind = jax.devices()[0].device_kind.lower()
    except Exception:
        pass
    if "v5" in kind:
        # 128x128 MXU: 128-deep contraction chunk, smaller tiles, 128 MiB phys VMEM.
        tn, chunk, vmem = 256, 128, 64 * 1024 * 1024
    elif "v6" in kind:
        # 256x256 MXU + 128 MiB phys VMEM: bigger tiles amortize per-step overhead.
        tn, chunk, vmem = 512, 256, 96 * 1024 * 1024
    else:
        # v7x (64 MiB phys VMEM per TC) and unknown chips: conservative budget.
        tn, chunk, vmem = 256, 256, 48 * 1024 * 1024
    if n <= tn:
        # Small graph: one destination tile, one contraction chunk, no padding
        # (block shape == full array dims satisfies the (8,128) rule).
        return n, n, n, vmem
    lcm = tn * chunk // math.gcd(tn, chunk)
    return tn, chunk, _round_up(n, lcm), vmem


def gin_conv_kernel(idx_ref, x_src_ref, x_dst_ref, w_ref, b_ref, eps_ref,
                    o_ref, xj_ref):
    # idx_ref  : (1, K, TN)        int32  neighbor indices for this dest tile
    # x_src_ref: (1, C_pad, CHUNK) f32    source-vertex features (contraction tile)
    # x_dst_ref: (1, C_pad, TN)    f32    dest-vertex features (for (1+eps)*x)
    # w_ref    : (Co_pad, C_pad)   f32    1x1-conv weight
    # b_ref    : (Co_pad, 1)       f32    bias
    # eps_ref  : (1,)              f32    SMEM scalar
    # o_ref    : (1, Co_pad, TN)   f32    output tile
    # xj_ref   : (C_pad, TN)       f32    VMEM accumulator for the neighbor sum
    c = pl.program_id(2)

    @pl.when(c == 0)
    def _():
        xj_ref[...] = jnp.zeros_like(xj_ref)

    k_nbrs = idx_ref.shape[1]
    tn = idx_ref.shape[2]
    chunk = x_src_ref.shape[2]

    # Counted-adjacency tile: counts[m, n] = #{k : idx[k, n] == c*CHUNK + m}.
    # (Indices outside [0, N) are silently dropped; valid by construction here.)
    idx = idx_ref[0]                                                   # (K, TN)
    m_vals = jax.lax.broadcasted_iota(jnp.int32, (chunk, tn), 0) + c * chunk
    counts = jnp.zeros((chunk, tn), jnp.int32)
    for k in range(k_nbrs):                        # K is small & static -> unrolled
        counts = counts + (idx[k:k + 1, :] == m_vals).astype(jnp.int32)

    # Single int->float convert per chunk; counts <= K are exact in f32.
    xj_ref[...] += jnp.dot(x_src_ref[0], counts.astype(jnp.float32),
                           preferred_element_type=jnp.float32)

    @pl.when(c == pl.num_programs(2) - 1)
    def _():
        eps = eps_ref[0]
        h = (1.0 + eps) * x_dst_ref[0] + xj_ref[...]                   # (C_pad, TN)
        out = jnp.dot(w_ref[...], h, preferred_element_type=jnp.float32) + b_ref[...]
        o_ref[0] = jnp.maximum(out, 0.0)          # fused bias + ReLU, lane-dense store


def gin_conv2d_pallas(x_nchw, edge_index, weight, bias, eps):
    """x_nchw: (B, C_in, N, 1); edge_index: (2, B, N, K); weight: (C_out, C_in, 1, 1)."""
    B, C_in, N, _ = x_nchw.shape
    C_out = weight.shape[0]
    K = edge_index.shape[-1]

    TN, CHUNK, n_pad, vmem_bytes = _select_tiles(N)
    c_in_pad = _round_up(C_in, 8)
    c_out_pad = _round_up(C_out, 8)

    # channel-major layout, no feature transposes
    x_cn = x_nchw[..., 0].astype(jnp.float32)                            # (B, C_in, N)
    idx_kn = jnp.transpose(edge_index[0], (0, 2, 1)).astype(jnp.int32)   # (B, K, N)
    w2 = weight.reshape(C_out, C_in).astype(jnp.float32)                 # (C_out, C_in)
    b2 = bias.reshape(C_out, 1).astype(jnp.float32)                      # (C_out, 1)
    eps1 = eps.reshape(1).astype(jnp.float32)                            # (1,)

    # zero-pad channels to sublane multiple (8) and vertices to the tile multiple
    x_cn = jnp.pad(x_cn, ((0, 0), (0, c_in_pad - C_in), (0, n_pad - N)))
    idx_kn = jnp.pad(idx_kn, ((0, 0), (0, 0), (0, n_pad - N)))
    w2 = jnp.pad(w2, ((0, c_out_pad - C_out), (0, c_in_pad - C_in)))
    b2 = jnp.pad(b2, ((0, c_out_pad - C_out), (0, 0)))

    out_cn = pl.pallas_call(
        gin_conv_kernel,
        out_shape=jax.ShapeDtypeStruct((B, c_out_pad, n_pad), jnp.float32),
        grid_spec=pltpu.PrefetchScalarGridSpec(
            num_scalar_prefetch=0,
            grid=(B, n_pad // TN, n_pad // CHUNK),
            in_specs=[
                pl.BlockSpec((1, K, TN), lambda b, j, c: (b, 0, j)),            # idx
                pl.BlockSpec((1, c_in_pad, CHUNK), lambda b, j, c: (b, 0, c)),  # x (src)
                pl.BlockSpec((1, c_in_pad, TN), lambda b, j, c: (b, 0, j)),     # x (dst)
                pl.BlockSpec((c_out_pad, c_in_pad), lambda b, j, c: (0, 0)),    # W
                pl.BlockSpec((c_out_pad, 1), lambda b, j, c: (0, 0)),           # bias
                pl.BlockSpec(memory_space=pltpu.MemorySpace.SMEM),              # eps
            ],
            out_specs=pl.BlockSpec((1, c_out_pad, TN), lambda b, j, c: (b, 0, j)),
            scratch_shapes=[pltpu.VMEM((c_in_pad, TN), jnp.float32)],
        ),
        compiler_params=pltpu.CompilerParams(
            dimension_semantics=("parallel", "parallel", "arbitrary"),
            vmem_limit_bytes=vmem_bytes,
        ),
    )(idx_kn, x_cn, x_cn, w2, b2, eps1)

    # strip padding and restore NCHW: (B, C_out, N, 1)
    return out_cn[:, :C_out, :N][..., None]


def gin_conv2d_reference(x_nchw, edge_index, weight, bias, eps):
    """Pure-JAX reference mirroring the PyTorch forward."""
    B, C_in, N, _ = x_nchw.shape
    C_out = weight.shape[0]
    idx = edge_index[0]                                            # (B, N, K)
    x_bnc = jnp.transpose(x_nchw[..., 0], (0, 2, 1))               # (B, N, C_in)
    x_j = jax.vmap(lambda xb, ib: xb[ib])(x_bnc, idx)              # (B, N, K, C_in)
    x_j_sum = x_j.sum(axis=2)                                      # (B, N, C_in)
    h = (1.0 + eps[0]) * x_bnc + x_j_sum
    w2 = weight.reshape(C_out, C_in)
    out = jnp.maximum(jnp.einsum("bnc,oc->bno", h, w2) + bias, 0.0)
    return jnp.transpose(out, (0, 2, 1))[..., None]                # (B, C_out, N, 1)


if __name__ == "__main__":
    B, C_in, C_out, N, K = 2, 4, 8, 16, 4

    key = jax.random.PRNGKey(0)
    kx, kidx, kw, kb = jax.random.split(key, 4)

    # inputs (PyTorch NCHW dense-graph convention: (B, C, N, 1))
    x = jax.random.normal(kx, (B, C_in, N, 1), dtype=jnp.float32)
    edge_index = jax.random.randint(kidx, (2, B, N, K), 0, N, dtype=jnp.int32)

    # deterministic parameter init (Conv2d(C_in, C_out, 1, bias=True), eps=0.0)
    weight = jax.random.normal(kw, (C_out, C_in, 1, 1), dtype=jnp.float32) * 0.1
    bias = jax.random.normal(kb, (C_out,), dtype=jnp.float32) * 0.1
    eps = jnp.array([0.0], dtype=jnp.float32)

    out = gin_conv2d_pallas(x, edge_index, weight, bias, eps)
    out = jax.block_until_ready(out)

    ref = jax.block_until_ready(gin_conv2d_reference(x, edge_index, weight, bias, eps))
    assert out.shape == (B, C_out, N, 1), out.shape
    np.testing.assert_allclose(np.asarray(out), np.asarray(ref), rtol=1e-5, atol=1e-5)

    print("KERNEL_OK")
</pallas_src>

<mosaic_0001>
module attributes {stable_mosaic.version = 11 : i64} {
  func.func @gin_conv_kernel(%arg0: i32, %arg1: i32, %arg2: i32, %arg3: memref<1x4x16xi32, #tpu.memory_space<vmem>>, %arg4: memref<1x8x16xf32, #tpu.memory_space<vmem>>, %arg5: memref<1x8x16xf32, #tpu.memory_space<vmem>>, %arg6: memref<8x8xf32, #tpu.memory_space<vmem>>, %arg7: memref<8x1xf32, #tpu.memory_space<vmem>>, %arg8: memref<1xf32, #tpu.memory_space<smem>>, %arg9: memref<1x8x16xf32, #tpu.memory_space<vmem>>, %arg10: memref<8x16xf32, #tpu.memory_space<vmem>>) attributes {dimension_semantics = [#tpu.dimension_semantics<parallel>, #tpu.dimension_semantics<parallel>, #tpu.dimension_semantics<arbitrary>], iteration_bounds = array<i64: 2, 1, 1>, scalar_prefetch = 0 : i64, scratch_operands = 1 : i64, tpu.core_type = #tpu.core_type<tc>, window_params = [{transform_indices = @transform_0, window_bounds = array<i64: 1, 4, 16>}, {transform_indices = @transform_1, window_bounds = array<i64: 1, 8, 16>}, {transform_indices = @transform_2, window_bounds = array<i64: 1, 8, 16>}, {pipeline_mode = #tpu.pipeline_mode<synchronous>, transform_indices = @transform_3, window_bounds = array<i64: 8, 8>}, {pipeline_mode = #tpu.pipeline_mode<synchronous>, transform_indices = @transform_4, window_bounds = array<i64: 8, 1>}, {transform_indices = @transform_5, window_bounds = array<i64: 1>}, {transform_indices = @transform_6, window_bounds = array<i64: 1, 8, 16>}]} {
    %c0_i32 = arith.constant 0 : i32
    %0 = arith.cmpi eq, %arg2, %c0_i32 : i32
    %1 = arith.extui %0 : i1 to i32
    %c0_i32_0 = arith.constant 0 : i32
    %2 = arith.cmpi ne, %1, %c0_i32_0 : i32
    scf.if %2 {
      %cst_13 = arith.constant 0.000000e+00 : f32
      %40 = vector.broadcast %cst_13 : f32 to vector<8x16xf32>
      %c0_14 = arith.constant 0 : index
      %c0_15 = arith.constant 0 : index
      %41 = vector.load %arg10[%c0_14, %c0_15] : memref<8x16xf32, #tpu.memory_space<vmem>>, vector<8x16xf32>
      tpu.vector_store %arg10[%c0_14, %c0_15], %40 {strides = array<i32>} : memref<8x16xf32, #tpu.memory_space<vmem>>, vector<8x16xf32>,
    } else {
    }
    %c0 = arith.constant 0 : index
    %c0_1 = arith.constant 0 : index
    %c0_2 = arith.constant 0 : index
    %3 = vector.load %arg3[%c0, %c0_1, %c0_2] : memref<1x4x16xi32, #tpu.memory_space<vmem>>, vector<1x4x16xi32>
    %4 = vector.shape_cast %3 : vector<1x4x16xi32> to vector<4x16xi32>
    %5 = tpu.iota {dimensions = array<i32: 0>} : vector<16x16xi32>
    %c16_i32 = arith.constant 16 : i32
    %6 = arith.muli %arg2, %c16_i32 : i32
    %7 = vector.broadcast %6 : i32 to vector<16x16xi32>
    %8 = arith.addi %5, %7 : vector<16x16xi32>
    %c0_i32_3 = arith.constant 0 : i32
    %9 = vector.broadcast %c0_i32_3 : i32 to vector<16x16xi32>
    %10 = vector.extract_strided_slice %4 {offsets = [0, 0], sizes = [1, 16], strides = [1, 1]} : vector<4x16xi32> to vector<1x16xi32>
    %11 = vector.broadcast %10 : vector<1x16xi32> to vector<16x16xi32>
    %12 = arith.cmpi eq, %11, %8 : vector<16x16xi32>
    %13 = arith.extui %12 : vector<16x16xi1> to vector<16x16xi32>
    %14 = arith.addi %9, %13 : vector<16x16xi32>
    %15 = vector.extract_strided_slice %4 {offsets = [1, 0], sizes = [1, 16], strides = [1, 1]} : vector<4x16xi32> to vector<1x16xi32>
    %16 = vector.broadcast %15 : vector<1x16xi32> to vector<16x16xi32>
    %17 = arith.cmpi eq, %16, %8 : vector<16x16xi32>
    %18 = arith.extui %17 : vector<16x16xi1> to vector<16x16xi32>
    %19 = arith.addi %14, %18 : vector<16x16xi32>
    %20 = vector.extract_strided_slice %4 {offsets = [2, 0], sizes = [1, 16], strides = [1, 1]} : vector<4x16xi32> to vector<1x16xi32>
    %21 = vector.broadcast %20 : vector<1x16xi32> to vector<16x16xi32>
    %22 = arith.cmpi eq, %21, %8 : vector<16x16xi32>
    %23 = arith.extui %22 : vector<16x16xi1> to vector<16x16xi32>
    %24 = arith.addi %19, %23 : vector<16x16xi32>
    %25 = vector.extract_strided_slice %4 {offsets = [3, 0], sizes = [1, 16], strides = [1, 1]} : vector<4x16xi32> to vector<1x16xi32>
    %26 = vector.broadcast %25 : vector<1x16xi32> to vector<16x16xi32>
    %27 = arith.cmpi eq, %26, %8 : vector<16x16xi32>
    %28 = arith.extui %27 : vector<16x16xi1> to vector<16x16xi32>
    %29 = arith.addi %24, %28 : vector<16x16xi32>
    %c0_4 = arith.constant 0 : index
    %c0_5 = arith.constant 0 : index
    %30 = vector.load %arg10[%c0_4, %c0_5] : memref<8x16xf32, #tpu.memory_space<vmem>>, vector<8x16xf32>
    %c0_6 = arith.constant 0 : index
    %c0_7 = arith.constant 0 : index
    %c0_8 = arith.constant 0 : index
    %31 = vector.load %arg4[%c0_6, %c0_7, %c0_8] : memref<1x8x16xf32, #tpu.memory_space<vmem>>, vector<1x8x16xf32>
    %32 = vector.shape_cast %31 : vector<1x8x16xf32> to vector<8x16xf32>
    %33 = arith.sitofp %29 : vector<16x16xi32> to vector<16x16xf32>
    %cst = arith.constant dense<0.000000e+00> : vector<8x16xf32>
    %34 = tpu.matmul %32, %33, %cst {dimension_numbers = #tpu.dot_dimension_numbers<[1], [0], [0], [1], [0, 0, 1, 1], [], []>} : vector<8x16xf32>, vector<16x16xf32>, vector<8x16xf32> -> vector<8x16xf32>
    %35 = arith.addf %30, %34 : vector<8x16xf32>
    %c0_9 = arith.constant 0 : index
    %c0_10 = arith.constant 0 : index
    %36 = vector.load %arg10[%c0_9, %c0_10] : memref<8x16xf32, #tpu.memory_space<vmem>>, vector<8x16xf32>
    tpu.vector_store %arg10[%c0_9, %c0_10], %35 {strides = array<i32>} : memref<8x16xf32, #tpu.memory_space<vmem>>, vector<8x16xf32>,
    %c0_i32_11 = arith.constant 0 : i32
    %37 = arith.cmpi eq, %arg2, %c0_i32_11 : i32
    %38 = arith.extui %37 : i1 to i32
    %c0_i32_12 = arith.constant 0 : i32
    %39 = arith.cmpi ne, %38, %c0_i32_12 : i32
    scf.if %39 {
      %c0_13 = arith.constant 0 : index
      %40 = memref.load %arg8[%c0_13] : memref<1xf32, #tpu.memory_space<smem>>
      %cst_14 = arith.constant 1.000000e+00 : f32
      %41 = arith.addf %cst_14, %40 : f32
      %c0_15 = arith.constant 0 : index
      %c0_16 = arith.constant 0 : index
      %c0_17 = arith.constant 0 : index
      %42 = vector.load %arg5[%c0_15, %c0_16, %c0_17] : memref<1x8x16xf32, #tpu.memory_space<vmem>>, vector<1x8x16xf32>
      %43 = vector.shape_cast %42 : vector<1x8x16xf32> to vector<8x16xf32>
      %44 = vector.broadcast %41 : f32 to vector<8x16xf32>
      %45 = arith.mulf %44, %43 : vector<8x16xf32>
      %c0_18 = arith.constant 0 : index
      %c0_19 = arith.constant 0 : index
      %46 = vector.load %arg10[%c0_18, %c0_19] : memref<8x16xf32, #tpu.memory_space<vmem>>, vector<8x16xf32>
      %47 = arith.addf %45, %46 : vector<8x16xf32>
      %c0_20 = arith.constant 0 : index
      %c0_21 = arith.constant 0 : index
      %48 = vector.load %arg6[%c0_20, %c0_21] : memref<8x8xf32, #tpu.memory_space<vmem>>, vector<8x8xf32>
      %cst_22 = arith.constant dense<0.000000e+00> : vector<8x16xf32>
      %49 = tpu.matmul %48, %47, %cst_22 {dimension_numbers = #tpu.dot_dimension_numbers<[1], [0], [0], [1], [0, 0, 1, 1], [], []>} : vector<8x8xf32>, vector<8x16xf32>, vector<8x16xf32> -> vector<8x16xf32>
      %c0_23 = arith.constant 0 : index
      %c0_24 = arith.constant 0 : index
      %50 = vector.load %arg7[%c0_23, %c0_24] : memref<8x1xf32, #tpu.memory_space<vmem>>, vector<8x1xf32>
      %51 = vector.broadcast %50 : vector<8x1xf32> to vector<8x16xf32>
      %52 = arith.addf %49, %51 : vector<8x16xf32>
      %cst_25 = arith.constant 0.000000e+00 : f32
      %53 = vector.broadcast %cst_25 : f32 to vector<8x16xf32>
      %54 = arith.maximumf %52, %53 : vector<8x16xf32>
      %c0_26 = arith.constant 0 : index
      %c0_27 = arith.constant 0 : index
      %c0_28 = arith.constant 0 : index
      %55 = vector.load %arg9[%c0_26, %c0_27, %c0_28] : memref<1x8x16xf32, #tpu.memory_space<vmem>>, vector<1x8x16xf32>
      %56 = vector.shape_cast %55 : vector<1x8x16xf32> to vector<8x16xf32>
      %57 = vector.shape_cast %54 : vector<8x16xf32> to vector<1x8x16xf32>
      tpu.vector_store %arg9[%c0_26, %c0_27, %c0_28], %57 {strides = array<i32>} : memref<1x8x16xf32, #tpu.memory_space<vmem>>, vector<1x8x16xf32>,
    } else {
    }
    return
  }
  func.func @transform_0(%arg0: i32, %arg1: i32, %arg2: i32) -> (i32, i32, i32) {
    %c0_i32 = arith.constant 0 : i32
    %c0_i32_0 = arith.constant 0 : i32
    return %arg0, %c0_i32, %arg1 : i32, i32, i32
  }
  func.func @transform_1(%arg0: i32, %arg1: i32, %arg2: i32) -> (i32, i32, i32) {
    %c0_i32 = arith.constant 0 : i32
    %c0_i32_0 = arith.constant 0 : i32
    return %arg0, %c0_i32, %arg2 : i32, i32, i32
  }
  func.func @transform_2(%arg0: i32, %arg1: i32, %arg2: i32) -> (i32, i32, i32) {
    %c0_i32 = arith.constant 0 : i32
    %c0_i32_0 = arith.constant 0 : i32
    return %arg0, %c0_i32, %arg1 : i32, i32, i32
  }
  func.func @transform_3(%arg0: i32, %arg1: i32, %arg2: i32) -> (i32, i32) {
    %c0_i32 = arith.constant 0 : i32
    %c0_i32_0 = arith.constant 0 : i32
    %c0_i32_1 = arith.constant 0 : i32
    return %c0_i32, %c0_i32_0 : i32, i32
  }
  func.func @transform_4(%arg0: i32, %arg1: i32, %arg2: i32) -> (i32, i32) {
    %c0_i32 = arith.constant 0 : i32
    %c0_i32_0 = arith.constant 0 : i32
    %c0_i32_1 = arith.constant 0 : i32
    return %c0_i32, %c0_i32_0 : i32, i32
  }
  func.func @transform_5(%arg0: i32, %arg1: i32, %arg2: i32) -> i32 {
    %c0_i32 = arith.constant 0 : i32
    %c0_i32_0 = arith.constant 0 : i32
    return %c0_i32 : i32
  }
  func.func @transform_6(%arg0: i32, %arg1: i32, %arg2: i32) -> (i32, i32, i32) {
    %c0_i32 = arith.constant 0 : i32
    %c0_i32_0 = arith.constant 0 : i32
    return %arg0, %c0_i32, %arg1 : i32, i32, i32
  }
}

</mosaic_0001>

<llo_original>
// kernel: tpu_custom_call.1
$region0: #{tpu_custom_call.1}
  #allocation0 [shape = 'u32[]', space=smem, size = 0x4, offset = 0x4, fixed_abs, tag = 'smem constant byte address 0x4 - core index']
  #allocation1 [shape = 'u32[144,128]{1,0:T(1,128)}', space=vmem, size = 0x12000, scoped, tag = 'internal scratch']
  #allocation2 [shape = 'f32[8,16]{1,0:T(8,128)}', space=vmem, size = 0x1000, scoped, tag = 'scratch operand']
  #allocation3 [shape = 'f32[1]{0:T(128)S(6)}', space=smem, size = 0x200, scoped, tag = 'scoped memory for tpu_custom_call.1']
  %s0 = inlined_call_operand.vmem [shape: s32[2,4,16], index: 0, kind: input, shape index: {}]
  %s1 = inlined_call_operand.hbm [shape: f32[2,8,16], index: 1, kind: input, shape index: {}]
  %s2 = inlined_call_operand.hbm [shape: f32[2,8,16], index: 2, kind: input, shape index: {}]
  %s3 = inlined_call_operand.vmem [shape: f32[8,8], index: 3, kind: input, shape index: {}]
  %s4 = inlined_call_operand.vmem [shape: f32[8,1], index: 4, kind: input, shape index: {}]
  %s5 = inlined_call_operand.<no memory space> [shape: f32[1], index: 5, kind: input, shape index: {}]
  %s6 = inlined_call_operand.hbm [shape: f32[2,8,16], index: 6, kind: output, shape index: {}]
  %s7 = sld [smem:[#allocation0]]
  $region73: #{tpu_custom_call.1} parent=0
    _
  %s9 = ssub.s32 1, %s7
  %s10 = scalar_select 0, %s9, %s7
  %11 = sst [smem:[#allocation3]] %s5
  $region1: #{tpu_custom_call.1} parent=0
    #allocation4 [shape = 'u8[8192]{0}', space=vmem, size = 0x2000, scoped, tag = 'input window, operand 1']
    #allocation5 [shape = 's32[2]{0}', space=sflag, size = 0x8, scoped, tag = 'scoped memory for tpu_custom_call.1']
    #allocation6 [shape = 's32[2]{0}', space=sflag, size = 0x8, scoped, tag = 'scoped memory for tpu_custom_call.1']
    #allocation7 [shape = 'u8[8192]{0}', space=vmem, size = 0x2000, scoped, tag = 'input window, operand 2']
    #allocation8 [shape = 's32[2]{0}', space=sflag, size = 0x8, scoped, tag = 'scoped memory for tpu_custom_call.1']
    #allocation9 [shape = 'u8[8192]{0}', space=vmem, size = 0x2000, scoped, tag = 'output window, operand 0']
    %12 = vsyncpa [#allocation5], 0
    %s13 = scalar_lea.sflag [#allocation5], 1
    %14 = vsyncpa %s13, 0
    %15 = vsyncpa [#allocation8], 0
    %s16 = scalar_lea.sflag [#allocation8], 1
    %17 = vsyncpa %s16, 0
    %18 = vsyncpa [#allocation6], 0
    %s19 = scalar_lea.sflag [#allocation6], 1
    %20 = vsyncpa %s19, 0
    loop: start=0, step=1, limit=4
    $region2: #{tpu_custom_call.1} parent=1 // loop_pre_header
      _
    $region3: #{tpu_custom_call.1} parent=1 // loop_header
      %s22 = sphi 0, %s26
      %p23 = scmp.ge.s32.totalorder %s22, 4
      %s29 = sphi 0, %s48
      %s30 = sphi 0, %s44
      %s31 = sphi 0, %s40
      %s32 = sphi 0, %s29
      %s33 = sphi 0, %s30
      %s34 = sphi 0, %s31
      %s35 = sphi 0, %s32
      %s36 = sphi 0, %s33
      %s37 = sphi 0, %s34
      %s53 = sphi 0, %s55
      %s56 = sphi 0, %s53
      %s57 = sphi 0, %s56
      %s73 = sphi 0, %s57
      %s81 = sphi 0, %s83
      %s84 = sphi 0, %s81
      %s85 = sphi 0, %s84
      %s101 = sphi 0, %s85
      %s109 = sphi 0, %s111
      %s112 = sphi 0, %s109
      %s113 = sphi 0, %s112
      %s129 = sphi 0, %s113
      %s133 = sphi 0, %s133
      %s135 = sphi 0, %s133
      %s136 = sphi 0, %s135
      %s150 = sphi 0, %s136
      %s154 = sphi 0, %s154
      %s156 = sphi 0, %s154
      %s157 = sphi 0, %s156
      %s171 = sphi 0, %s157
      %s175 = sphi 0, %s175
      %s177 = sphi 0, %s175
      %s178 = sphi 0, %s177
      %s192 = sphi 0, %s178
      %s200 = sphi 0, %s202
      %s203 = sphi 0, %s200
      %s204 = sphi 0, %s203
      %s220 = sphi 0, %s204
    $region4: #{tpu_custom_call.1} parent=1 // loop_header_branch
      %25 = sbr.rel (%p23) target = $region8
    $region5: #{tpu_custom_call.1} parent=1 // loop_body
      %s27 = ssub.s32 %s22, 1
      %s28 = ssub.s32 %s22, 2
      %s38 = sadd.s32 1, %s31
      %p39 = scmp.ge.s32.totalorder %s38, 1
      %s40 = scalar_select %p39, 0, %s38
      %s41 = sadd.s32 1, %s30
      %s42 = scalar_select %p39, %s41, %s30
      %p43 = scmp.ge.s32.totalorder %s42, 1
      %s44 = scalar_select %p43, 0, %s42
      %s45 = sadd.s32 1, %s29
      %s46 = scalar_select %p43, %s45, %s29
      %p47 = scmp.ge.s32.totalorder %s46, 2
      %s48 = scalar_select %p47, 0, %s46
      %s49 = ssub.s32 %s29, %s48
      %s50 = ssub.s32 %s30, %s44
      %s51 = sor.u32 %s49, %s50
      %p52 = scmp.eq.s32.totalorder %s51, 0
      %s54 = sadd.s32 %s53, 1
      %s55 = scalar_select %p52, %s53, %s54
      %p58 = pneg %p52
      %p59 = scmp.eq.s32.totalorder %s22, 1
      %p60 = por %p58, %p59
      %p61 = scmp.ne.s32.totalorder %s53, %s56
      %p62 = scmp.eq.s32.totalorder %s22, 0
      %p63 = por %p61, %p62
      %p64 = scmp.ne.s32.totalorder %s53, %s56
      %p65 = scmp.eq.s32.totalorder %s27, 1
      %p66 = por %p64, %p65
      %p67 = scmp.ne.s32.totalorder %s56, %s57
      %p68 = scmp.eq.s32.totalorder %s27, 0
      %p69 = por %p67, %p68
      %p70 = scmp.ne.s32.totalorder %s56, %s57
      %p71 = scmp.eq.s32.totalorder %s28, 1
      %p72 = por %p70, %p71
      %p74 = scmp.ne.s32.totalorder %s57, %s73
      %p75 = scmp.eq.s32.totalorder %s28, 0
      %p76 = por %p74, %p75
      %s77 = ssub.s32 %s29, %s48
      %s78 = ssub.s32 %s31, %s40
      %s79 = sor.u32 %s77, %s78
      %p80 = scmp.eq.s32.totalorder %s79, 0
      %s82 = sadd.s32 %s81, 1
      %s83 = scalar_select %p80, %s81, %s82
      %p86 = pneg %p80
      %p87 = scmp.eq.s32.totalorder %s22, 1
      %p88 = por %p86, %p87
      %p89 = scmp.ne.s32.totalorder %s81, %s84
      %p90 = scmp.eq.s32.totalorder %s22, 0
      %p91 = por %p89, %p90
      %p92 = scmp.ne.s32.totalorder %s81, %s84
      %p93 = scmp.eq.s32.totalorder %s27, 1
      %p94 = por %p92, %p93
      %p95 = scmp.ne.s32.totalorder %s84, %s85
      %p96 = scmp.eq.s32.totalorder %s27, 0
      %p97 = por %p95, %p96
      %p98 = scmp.ne.s32.totalorder %s84, %s85
      %p99 = scmp.eq.s32.totalorder %s28, 1
      %p100 = por %p98, %p99
      %p102 = scmp.ne.s32.totalorder %s85, %s101
      %p103 = scmp.eq.s32.totalorder %s28, 0
      %p104 = por %p102, %p103
      %s105 = ssub.s32 %s29, %s48
      %s106 = ssub.s32 %s30, %s44
      %s107 = sor.u32 %s105, %s106
      %p108 = scmp.eq.s32.totalorder %s107, 0
      %s110 = sadd.s32 %s109, 1
      %s111 = scalar_select %p108, %s109, %s110
      %p114 = pneg %p108
      %p115 = scmp.eq.s32.totalorder %s22, 1
      %p116 = por %p114, %p115
      %p117 = scmp.ne.s32.totalorder %s109, %s112
      %p118 = scmp.eq.s32.totalorder %s22, 0
      %p119 = por %p117, %p118
      %p120 = scmp.ne.s32.totalorder %s109, %s112
      %p121 = scmp.eq.s32.totalorder %s27, 1
      %p122 = por %p120, %p121
      %p123 = scmp.ne.s32.totalorder %s112, %s113
      %p124 = scmp.eq.s32.totalorder %s27, 0
      %p125 = por %p123, %p124
      %p126 = scmp.ne.s32.totalorder %s112, %s113
      %p127 = scmp.eq.s32.totalorder %s28, 1
      %p128 = por %p126, %p127
      %p130 = scmp.ne.s32.totalorder %s113, %s129
      %p131 = scmp.eq.s32.totalorder %s28, 0
      %p132 = por %p130, %p131
      %s134 = sadd.s32 %s133, 1
      %p137 = scmp.eq.s32.totalorder %s22, 1
      %p138 = scmp.ne.s32.totalorder %s133, %s135
      %p139 = scmp.eq.s32.totalorder %s22, 0
      %p140 = por %p138, %p139
      %p141 = scmp.ne.s32.totalorder %s133, %s135
      %p142 = scmp.eq.s32.totalorder %s27, 1
      %p143 = por %p141, %p142
      %p144 = scmp.ne.s32.totalorder %s135, %s136
      %p145 = scmp.eq.s32.totalorder %s27, 0
      %p146 = por %p144, %p145
      %p147 = scmp.ne.s32.totalorder %s135, %s136
      %p148 = scmp.eq.s32.totalorder %s28, 1
      %p149 = por %p147, %p148
      %p151 = scmp.ne.s32.totalorder %s136, %s150
      %p152 = scmp.eq.s32.totalorder %s28, 0
      %p153 = por %p151, %p152
      %s155 = sadd.s32 %s154, 1
      %p158 = scmp.eq.s32.totalorder %s22, 1
      %p159 = scmp.ne.s32.totalorder %s154, %s156
      %p160 = scmp.eq.s32.totalorder %s22, 0
      %p161 = por %p159, %p160
      %p162 = scmp.ne.s32.totalorder %s154, %s156
      %p163 = scmp.eq.s32.totalorder %s27, 1
      %p164 = por %p162, %p163
      %p165 = scmp.ne.s32.totalorder %s156, %s157
      %p166 = scmp.eq.s32.totalorder %s27, 0
      %p167 = por %p165, %p166
      %p168 = scmp.ne.s32.totalorder %s156, %s157
      %p169 = scmp.eq.s32.totalorder %s28, 1
      %p170 = por %p168, %p169
      %p172 = scmp.ne.s32.totalorder %s157, %s171
      %p173 = scmp.eq.s32.totalorder %s28, 0
      %p174 = por %p172, %p173
      %s176 = sadd.s32 %s175, 1
      %p179 = scmp.eq.s32.totalorder %s22, 1
      %p180 = scmp.ne.s32.totalorder %s175, %s177
      %p181 = scmp.eq.s32.totalorder %s22, 0
      %p182 = por %p180, %p181
      %p183 = scmp.ne.s32.totalorder %s175, %s177
      %p184 = scmp.eq.s32.totalorder %s27, 1
      %p185 = por %p183, %p184
      %p186 = scmp.ne.s32.totalorder %s177, %s178
      %p187 = scmp.eq.s32.totalorder %s27, 0
      %p188 = por %p186, %p187
      %p189 = scmp.ne.s32.totalorder %s177, %s178
      %p190 = scmp.eq.s32.totalorder %s28, 1
      %p191 = por %p189, %p190
      %p193 = scmp.ne.s32.totalorder %s178, %s192
      %p194 = scmp.eq.s32.totalorder %s28, 0
      %p195 = por %p193, %p194
      %s196 = ssub.s32 %s29, %s48
      %s197 = ssub.s32 %s30, %s44
      %s198 = sor.u32 %s196, %s197
      %p199 = scmp.eq.s32.totalorder %s198, 0
      %s201 = sadd.s32 %s200, 1
      %s202 = scalar_select %p199, %s200, %s201
      %p205 = pneg %p199
      %p206 = scmp.eq.s32.totalorder %s22, 1
      %p207 = por %p205, %p206
      %p208 = scmp.ne.s32.totalorder %s200, %s203
      %p209 = scmp.eq.s32.totalorder %s22, 0
      %p210 = por %p208, %p209
      %p211 = scmp.ne.s32.totalorder %s200, %s203
      %p212 = scmp.eq.s32.totalorder %s27, 1
      %p213 = por %p211, %p212
      %p214 = scmp.ne.s32.totalorder %s203, %s204
      %p215 = scmp.eq.s32.totalorder %s27, 0
      %p216 = por %p214, %p215
      %p217 = scmp.ne.s32.totalorder %s203, %s204
      %p218 = scmp.eq.s32.totalorder %s28, 1
      %p219 = por %p217, %p218
      %p221 = scmp.ne.s32.totalorder %s204, %s220
      %p222 = scmp.eq.s32.totalorder %s28, 0
      %p223 = por %p221, %p222
      %p224 = scmp.le.s32.totalorder 1, %s22
      %p225 = scmp.lt.s32.totalorder %s22, 3
      %p226 = pnand %p224, %p225
      %p227 = pneg %p226
      // Predicated region
      $region9: #{tpu_custom_call.1} parent=5 // pred_check
        _
      $region10: #{tpu_custom_call.1} parent=5 // pred_check_branch
        %229 = sbr.rel (%p226) target = $region12
      $region11: #{tpu_custom_call.1} parent=5 // pred_region
        %s230 = ssub.s32 %s22, 1
        // Predicated region
        $region13: #{tpu_custom_call.1} parent=11 // pred_check
          %p231 = pneg %p146
        $region14: #{tpu_custom_call.1} parent=11 // pred_check_branch
          %233 = sbr.rel (%p231) target = $region16
        $region15: #{tpu_custom_call.1} parent=11 // pred_region
          _
        $region16: #{tpu_custom_call.1} parent=11 // pred_fallthru
          _
        // Predicated region
        $region17: #{tpu_custom_call.1} parent=11 // pred_check
          %p234 = pneg %p167
        $region18: #{tpu_custom_call.1} parent=11 // pred_check_branch
          %236 = sbr.rel (%p234) target = $region20
        $region19: #{tpu_custom_call.1} parent=11 // pred_region
          _
        $region20: #{tpu_custom_call.1} parent=11 // pred_fallthru
          _
        // Predicated region
        $region21: #{tpu_custom_call.1} parent=11 // pred_check
          %p237 = pneg %p188
        $region22: #{tpu_custom_call.1} parent=11 // pred_check_branch
          %239 = sbr.rel (%p237) target = $region24
        $region23: #{tpu_custom_call.1} parent=11 // pred_region
          _
        $region24: #{tpu_custom_call.1} parent=11 // pred_fallthru
          _
      $region12: #{tpu_custom_call.1} parent=5 // pred_fallthru
        _
      %p240 = scmp.lt.s32.totalorder %s22, 2
      // Predicated region
      $region25: #{tpu_custom_call.1} parent=5 // pred_check
        %p241 = pneg %p240
      $region26: #{tpu_custom_call.1} parent=5 // pred_check_branch
        %243 = sbr.rel (%p241) target = $region28
      $region27: #{tpu_custom_call.1} parent=5 // pred_region
        // Predicated region
        $region29: #{tpu_custom_call.1} parent=27 // pred_check
          %p244 = pneg %p63
        $region30: #{tpu_custom_call.1} parent=27 // pred_check_branch
          %246 = sbr.rel (%p244) target = $region32
        $region31: #{tpu_custom_call.1} parent=27 // pred_region
          %p247 = scmp.lt.s32.totalorder %s29, 1
          %s248 = scalar_select %p247, %s29, 1
          %p249 = scmp.lt.s32.totalorder %s30, 0
          %s250 = scalar_select %p249, %s30, 0
          %s251 = sadd.s32 %s250, %s248
          %s252 = smul.addr %s251, 4
          %s253 = scalar_lea.vmem %s0, %s252
        $region32: #{tpu_custom_call.1} parent=27 // pred_fallthru
          _
        // Predicated region
        $region33: #{tpu_custom_call.1} parent=27 // pred_check
          %p254 = pneg %p91
        $region34: #{tpu_custom_call.1} parent=27 // pred_check_branch
          %256 = sbr.rel (%p254) target = $region36
        $region35: #{tpu_custom_call.1} parent=27 // pred_region
          %s257 = sand.u32 %s81, 1
          %s258 = scalar_lea.sflag [#allocation5], %s257
          %s259 = sand.u32 %s81, 1
          %s260 = smul.addr %s259, 8
          %s261 = scalar_lea.vmem [#allocation4], %s260
          %s263 = ssub.s32 128, 128
          %264 = vsyncadd %s258, %s263
          %s265 = sadd.s32 %s31, %s29
          %s266 = smul.addr %s265, 128
          %s267 = scalar_lea.hbm %s1, %s266
          %s269 = sshll.u32 %s261, 4
          %s270 = int_to_ptr.vmem [resolvable:$true] %s269
          %272 = dma.hbm_to_vmem [thread:$0]  %s267, 128, %s270, %s258
        $region36: #{tpu_custom_call.1} parent=27 // pred_fallthru
          _
        // Predicated region
        $region37: #{tpu_custom_call.1} parent=27 // pred_check
          %p273 = pneg %p119
        $region38: #{tpu_custom_call.1} parent=27 // pred_check_branch
          %275 = sbr.rel (%p273) target = $region40
        $region39: #{tpu_custom_call.1} parent=27 // pred_region
          %s276 = sand.u32 %s109, 1
          %s277 = scalar_lea.sflag [#allocation8], %s276
          %s278 = sand.u32 %s109, 1
          %s279 = smul.addr %s278, 8
          %s280 = scalar_lea.vmem [#allocation7], %s279
          %s282 = ssub.s32 128, 128
          %283 = vsyncadd %s277, %s282
          %s284 = sadd.s32 %s30, %s29
          %s285 = smul.addr %s284, 128
          %s286 = scalar_lea.hbm %s2, %s285
          %s288 = sshll.u32 %s280, 4
          %s289 = int_to_ptr.vmem [resolvable:$true] %s288
          %291 = dma.hbm_to_vmem [thread:$0]  %s286, 128, %s289, %s277
        $region40: #{tpu_custom_call.1} parent=27 // pred_fallthru
          _
      $region28: #{tpu_custom_call.1} parent=5 // pred_fallthru
        _
      %p292 = scmp.le.s32.totalorder 1, %s22
      %p293 = scmp.lt.s32.totalorder %s22, 3
      %p294 = pnand %p292, %p293
      %p295 = pneg %p294
      // Predicated region
      $region41: #{tpu_custom_call.1} parent=5 // pred_check
        _
      $region42: #{tpu_custom_call.1} parent=5 // pred_check_branch
        %297 = sbr.rel (%p294) target = $region44
      $region43: #{tpu_custom_call.1} parent=5 // pred_region
        %s298 = ssub.s32 %s22, 1
        %s299 = sand.u32 %s84, 1
        %s300 = scalar_lea.sflag [#allocation5], %s299
        %s301 = sand.u32 %s84, 1
        %s302 = smul.addr %s301, 8
        %s303 = scalar_lea.vmem [#allocation4], %s302
        // Predicated region
        $region45: #{tpu_custom_call.1} parent=43 // pred_check
          %p304 = pneg %p97
        $region46: #{tpu_custom_call.1} parent=43 // pred_check_branch
          %306 = sbr.rel (%p304) target = $region48
        $region47: #{tpu_custom_call.1} parent=43 // pred_region
          %307 = dma.done %s300, 128
        $region48: #{tpu_custom_call.1} parent=43 // pred_fallthru
          _
        %s308 = sand.u32 %s112, 1
        %s309 = scalar_lea.sflag [#allocation8], %s308
        %s310 = sand.u32 %s112, 1
        %s311 = smul.addr %s310, 8
        %s312 = scalar_lea.vmem [#allocation7], %s311
        // Predicated region
        $region49: #{tpu_custom_call.1} parent=43 // pred_check
          %p313 = pneg %p125
        $region50: #{tpu_custom_call.1} parent=43 // pred_check_branch
          %315 = sbr.rel (%p313) target = $region52
        $region51: #{tpu_custom_call.1} parent=43 // pred_region
          %316 = dma.done %s309, 128
        $region52: #{tpu_custom_call.1} parent=43 // pred_fallthru
          _
        %p317 = scmp.lt.s32.totalorder %s32, 1
        %s318 = scalar_select %p317, %s32, 1
        %p319 = scmp.lt.s32.totalorder %s33, 0
        %s320 = scalar_select %p319, %s33, 0
        %s321 = sadd.s32 %s320, %s318
        %s322 = smul.addr %s321, 4
        %s323 = scalar_lea.vmem %s0, %s322
        %p324 = pneg %p69
        %p325 = pneg %p66
        %s326 = sand.u32 %s84, 1
        %s327 = scalar_lea.sflag [#allocation5], %s326
        %s328 = sand.u32 %s84, 1
        %s329 = smul.addr %s328, 8
        %s330 = scalar_lea.vmem [#allocation4], %s329
        %p331 = pneg %p97
        %p332 = pneg %p94
        %s333 = sand.u32 %s112, 1
        %s334 = scalar_lea.sflag [#allocation8], %s333
        %s335 = sand.u32 %s112, 1
        %s336 = smul.addr %s335, 8
        %s337 = scalar_lea.vmem [#allocation7], %s336
        %p338 = pneg %p125
        %p339 = pneg %p122
        %p340 = pneg %p146
        %p341 = pneg %p143
        %p342 = pneg %p167
        %p343 = pneg %p164
        %p344 = pneg %p188
        %p345 = pneg %p185
        %p346 = pneg %p216
        %p347 = pneg %p213
        %s348 = sand.u32 %s203, 1
        %s349 = scalar_lea.sflag [#allocation6], %s348
        %s350 = sand.u32 %s203, 1
        %s351 = smul.addr %s350, 8
        %s352 = scalar_lea.vmem [#allocation9], %s351
        %p353 = scmp.lt.s32.totalorder %s32, 1
        %s354 = scalar_select %p353, %s32, 1
        %p355 = scmp.lt.s32.totalorder %s33, 0
        %s356 = scalar_select %p355, %s33, 0
        %s357 = sadd.s32 %s356, %s354
        %s358 = smul.addr %s357, 4
        %s359 = scalar_lea.vmem %s0, %s358
        %p360 = scmp.eq.s32.totalorder %s34, 0
        // Predicated region
        $region53: #{tpu_custom_call.1} parent=43 // pred_check
          %p361 = pneg %p360
        $region54: #{tpu_custom_call.1} parent=43 // pred_check_branch
          %363 = sbr.rel (%p361) target = $region56
        $region55: #{tpu_custom_call.1} parent=43 // pred_region
          %vm364 = vcmask 130048
          %365 = vst.msk [vmem:[#allocation2] sm:$0xff] %vm364, 0.0
        $region56: #{tpu_custom_call.1} parent=43 // pred_fallthru
          _
        %v366 = vld [vmem:[%s359] sm:$0xf]
        %v367 = vlaneseq
        %v368 = vshrl.u32 %v367, 7
        %v369 = vadd.s32 %v368, 8
        %s370 = smul.u32 %s34, 16
        %v371 = vstv %s370
        %v372 = vadd.s32 %v368, %v371
        %v373 = vadd.s32 %v369, %v371
        %v374 = vlaneseq
        %v375 = vshrl.u32 %v374, 7
        %v376 = vsub.s32 0, %v375
        %v377 = vrot.slane %v366, %v376
        %vm378 = vcmp.eq.s32.totalorder %v377, %v372
        %vm379 = vcmp.eq.s32.totalorder %v377, %v373
        %v380 = vsel %vm378, 1, 0
        %v381 = vsel %vm379, 1, 0
        %v382 = vlaneseq
        %v383 = vshrl.u32 %v382, 7
        %v384 = vsub.s32 1, %v383
        %v385 = vrot.slane %v366, %v384
        %vm386 = vcmp.eq.s32.totalorder %v385, %v372
        %vm387 = vcmp.eq.s32.totalorder %v385, %v373
        %v388 = vsel %vm386, 1, 0
        %v389 = vsel %vm387, 1, 0
        %v390 = vadd.s32 %v380, %v388
        %v391 = vadd.s32 %v381, %v389
        %v392 = vlaneseq
        %v393 = vshrl.u32 %v392, 7
        %v394 = vsub.s32 2, %v393
        %v395 = vrot.slane %v366, %v394
        %vm396 = vcmp.eq.s32.totalorder %v395, %v372
        %vm397 = vcmp.eq.s32.totalorder %v395, %v373
        %v398 = vsel %vm396, 1, 0
        %v399 = vsel %vm397, 1, 0
        %v400 = vadd.s32 %v390, %v398
        %v401 = vadd.s32 %v391, %v399
        %v402 = vlaneseq
        %v403 = vshrl.u32 %v402, 7
        %v404 = vsub.s32 3, %v403
        %v405 = vrot.slane %v366, %v404
        %vm406 = vcmp.eq.s32.totalorder %v405, %v372
        %vm407 = vcmp.eq.s32.totalorder %v405, %v373
        %v408 = vsel %vm406, 1, 0
        %v409 = vsel %vm407, 1, 0
        %v410 = vadd.s32 %v400, %v408
        %v411 = vadd.s32 %v401, %v409
        %v412 = vld [vmem:[#allocation2] sm:$0xff]
        %v413 = vld [vmem:[%s303] sm:$0xff]
        %v414 = vcvt.s32.f32 %v410
        %v415 = vcvt.s32.f32 %v411
        %vm416 = vcmask 130048
        %v418 = vsel %vm416, %v413, 0
        %420 = vmatprep.subr.mxu0 0.0
        %421 = vmatpush1.msra.mxu0 0.0
        %422 = vmatprep.subr.mxu0 0.0
        %423 = vmatpush1.msra.mxu0 0.0
        %424 = vmatprep.subr.mxu0 0.0
        %425 = vmatpush1.msra.mxu0 0.0
        %426 = vmatprep.subr.mxu0 0.0
        %427 = vmatpush1.msra.mxu0 0.0
        %428 = vmatprep.subr.mxu0 0.0
        %429 = vmatpush1.msra.mxu0 0.0
        %430 = vmatprep.subr.mxu0 0.0
        %431 = vmatpush1.msra.mxu0 0.0
        %432 = vmatprep.subr.mxu0 0.0
        %433 = vmatpush1.msra.mxu0 0.0
        %434 = vmatprep.subr.mxu0 0.0
        %435 = vmatpush1.msra.mxu0 0.0
        %436 = vmatprep.subr.mxu0 0.0
        %437 = vmatpush1.msra.mxu0 0.0
        %438 = vmatprep.subr.mxu0 0.0
        %439 = vmatpush1.msra.mxu0 0.0
        %440 = vmatprep.subr.mxu0 0.0
        %441 = vmatpush1.msra.mxu0 0.0
        %442 = vmatprep.subr.mxu0 0.0
        %443 = vmatpush1.msra.mxu0 0.0
        %444 = vmatprep.subr.mxu0 0.0
        %445 = vmatpush1.msra.mxu0 0.0
        %446 = vmatprep.subr.mxu0 0.0
        %447 = vmatpush1.msra.mxu0 0.0
        %448 = vmatprep.subr.mxu0 0.0
        %449 = vmatpush1.msra.mxu0 %v415
        %450 = vmatprep.subr.mxu0 0.0
        %451 = vmatpush1.msra.mxu0 %v414
        %452 = vmatprep.subr.mxu0 0.0
        %453 = vmatpush2.msra.mxu0 0.0
        %454 = vmatprep.subr.mxu0 0.0
        %455 = vmatpush2.msra.mxu0 0.0
        %456 = vmatprep.subr.mxu0 0.0
        %457 = vmatpush2.msra.mxu0 0.0
        %458 = vmatprep.subr.mxu0 0.0
        %459 = vmatpush2.msra.mxu0 0.0
        %460 = vmatprep.subr.mxu0 0.0
        %461 = vmatpush2.msra.mxu0 0.0
        %462 = vmatprep.subr.mxu0 0.0
        %463 = vmatpush2.msra.mxu0 0.0
        %464 = vmatprep.subr.mxu0 0.0
        %465 = vmatpush2.msra.mxu0 0.0
        %466 = vmatprep.subr.mxu0 0.0
        %467 = vmatpush2.msra.mxu0 0.0
        %468 = vmatprep.subr.mxu0 0.0
        %469 = vmatpush2.msra.mxu0 0.0
        %470 = vmatprep.subr.mxu0 0.0
        %471 = vmatpush2.msra.mxu0 0.0
        %472 = vmatprep.subr.mxu0 0.0
        %473 = vmatpush2.msra.mxu0 0.0
        %474 = vmatprep.subr.mxu0 0.0
        %475 = vmatpush2.msra.mxu0 0.0
        %476 = vmatprep.subr.mxu0 0.0
        %477 = vmatpush2.msra.mxu0 0.0
        %478 = vmatprep.subr.mxu0 0.0
        %479 = vmatpush2.msra.mxu0 0.0
        %480 = vmatprep.subr.mxu0 0.0
        %481 = vmatpush2.msra.mxu0 0.0
        %482 = vmatprep.subr.mxu0 0.0
        %483 = vmatpush2.msra.mxu0 0.0
        %484 = vmatprep.mubr.f32.mxu0 0.0
        %485 = vmatmul.mubr.f32.gmra.mxu0 %v418
        %v486 = vpop.f32.mrf.mxu0
        %v487 = vadd.f32 0.0, %v486
        %v488 = vpop.f32.mrf.mxu0
        %489 = vdwg.mxu0
        %v490 = vadd.f32 %v412, %v487
        %491 = vst.msk [vmem:[#allocation2] sm:$0xff] %vm416, %v490
        // Predicated region
        $region57: #{tpu_custom_call.1} parent=43 // pred_check
          %p492 = pneg %p360
        $region58: #{tpu_custom_call.1} parent=43 // pred_check_branch
          %494 = sbr.rel (%p492) target = $region60
        $region59: #{tpu_custom_call.1} parent=43 // pred_region
          %s495 = sld [smem:[#allocation3]]
          %s496 = sadd.f32 %s495, 1.0
          %v497 = vld [vmem:[%s312] sm:$0xff]
          %v498 = vstv %s496
          %v499 = vmul.f32 %v498, %v497
          %v500 = vld [vmem:[#allocation2] sm:$0xff]
          %v501 = vadd.f32 %v499, %v500
          %v502 = vld [vmem:[%s3] sm:$0xff]
          %v503 = vld [vmem:[%s4] sm:$0xff]
          %505 = vset.pattern.permute.xlu0 0
          %506 = vperm.xlu0 %505, %v503
          %v507 = vpop.permute.xlu0 %506
          %vm509 = vcmask 64512
          %v511 = vsel %vm509, %v502, 0
          %513 = vmatprep.subr.mxu0 0.0
          %514 = vmatpush1.msra.mxu0 0.0
          %515 = vmatprep.subr.mxu0 0.0
          %516 = vmatpush1.msra.mxu0 0.0
          %517 = vmatprep.subr.mxu0 0.0
          %518 = vmatpush1.msra.mxu0 0.0
          %519 = vmatprep.subr.mxu0 0.0
          %520 = vmatpush1.msra.mxu0 0.0
          %521 = vmatprep.subr.mxu0 0.0
          %522 = vmatpush1.msra.mxu0 0.0
          %523 = vmatprep.subr.mxu0 0.0
          %524 = vmatpush1.msra.mxu0 0.0
          %525 = vmatprep.subr.mxu0 0.0
          %526 = vmatpush1.msra.mxu0 0.0
          %527 = vmatprep.subr.mxu0 0.0
          %528 = vmatpush1.msra.mxu0 0.0
          %529 = vmatprep.subr.mxu0 0.0
          %530 = vmatpush1.msra.mxu0 0.0
          %531 = vmatprep.subr.mxu0 0.0
          %532 = vmatpush1.msra.mxu0 0.0
          %533 = vmatprep.subr.mxu0 0.0
          %534 = vmatpush1.msra.mxu0 0.0
          %535 = vmatprep.subr.mxu0 0.0
          %536 = vmatpush1.msra.mxu0 0.0
          %537 = vmatprep.subr.mxu0 0.0
          %538 = vmatpush1.msra.mxu0 0.0
          %539 = vmatprep.subr.mxu0 0.0
          %540 = vmatpush1.msra.mxu0 0.0
          %541 = vmatprep.subr.mxu0 0.0
          %542 = vmatpush1.msra.mxu0 0.0
          %543 = vmatprep.subr.mxu0 0.0
          %544 = vmatpush1.msra.mxu0 %v501
          %545 = vmatprep.subr.mxu0 0.0
          %546 = vmatpush2.msra.mxu0 0.0
          %547 = vmatprep.subr.mxu0 0.0
          %548 = vmatpush2.msra.mxu0 0.0
          %549 = vmatprep.subr.mxu0 0.0
          %550 = vmatpush2.msra.mxu0 0.0
          %551 = vmatprep.subr.mxu0 0.0
          %552 = vmatpush2.msra.mxu0 0.0
          %553 = vmatprep.subr.mxu0 0.0
          %554 = vmatpush2.msra.mxu0 0.0
          %555 = vmatprep.subr.mxu0 0.0
          %556 = vmatpush2.msra.mxu0 0.0
          %557 = vmatprep.subr.mxu0 0.0
          %558 = vmatpush2.msra.mxu0 0.0
          %559 = vmatprep.subr.mxu0 0.0
          %560 = vmatpush2.msra.mxu0 0.0
          %561 = vmatprep.subr.mxu0 0.0
          %562 = vmatpush2.msra.mxu0 0.0
          %563 = vmatprep.subr.mxu0 0.0
          %564 = vmatpush2.msra.mxu0 0.0
          %565 = vmatprep.subr.mxu0 0.0
          %566 = vmatpush2.msra.mxu0 0.0
          %567 = vmatprep.subr.mxu0 0.0
          %568 = vmatpush2.msra.mxu0 0.0
          %569 = vmatprep.subr.mxu0 0.0
          %570 = vmatpush2.msra.mxu0 0.0
          %571 = vmatprep.subr.mxu0 0.0
          %572 = vmatpush2.msra.mxu0 0.0
          %573 = vmatprep.subr.mxu0 0.0
          %574 = vmatpush2.msra.mxu0 0.0
          %575 = vmatprep.subr.mxu0 0.0
          %576 = vmatpush2.msra.mxu0 0.0
          %577 = vmatprep.mubr.f32.mxu0 0.0
          %578 = vmatmul.mubr.f32.gmra.mxu0 %v511
          %v579 = vpop.f32.mrf.mxu0
          %v580 = vadd.f32 %v507, %v579
          %v581 = vpop.f32.mrf.mxu0
          %582 = vdwg.mxu0
          %v583 = vmax.f32 %v580, 0.0
          %584 = vst.msk [vmem:[%s352] sm:$0xff] %vm416, %v583
        $region60: #{tpu_custom_call.1} parent=43 // pred_fallthru
          _
        %s585 = sand.u32 %s203, 1
        %s586 = scalar_lea.sflag [#allocation6], %s585
        %s587 = sand.u32 %s203, 1
        %s588 = smul.addr %s587, 8
        %s589 = scalar_lea.vmem [#allocation9], %s588
        // Predicated region
        $region61: #{tpu_custom_call.1} parent=43 // pred_check
          %p590 = pneg %p213
        $region62: #{tpu_custom_call.1} parent=43 // pred_check_branch
          %592 = sbr.rel (%p590) target = $region64
        $region63: #{tpu_custom_call.1} parent=43 // pred_region
          %s594 = ssub.s32 128, 128
          %595 = vsyncadd %s586, %s594
          %s596 = sadd.s32 %s33, %s32
          %s597 = smul.addr %s596, 128
          %s598 = scalar_lea.hbm %s6, %s597
          %s600 = sshll.u32 %s589, 4
          %s601 = int_to_ptr.vmem [resolvable:$true] %s600
          %603 = dma.vmem_to_hbm [thread:$0]  %s601, 128, %s598, %s586
        $region64: #{tpu_custom_call.1} parent=43 // pred_fallthru
          _
      $region44: #{tpu_custom_call.1} parent=5 // pred_fallthru
        _
      %p604 = scmp.le.s32.totalorder 2, %s22
      // Predicated region
      $region65: #{tpu_custom_call.1} parent=5 // pred_check
        %p605 = pneg %p604
      $region66: #{tpu_custom_call.1} parent=5 // pred_check_branch
        %607 = sbr.rel (%p605) target = $region68
      $region67: #{tpu_custom_call.1} parent=5 // pred_region
        %s608 = ssub.s32 %s22, 2
        // Predicated region
        $region69: #{tpu_custom_call.1} parent=67 // pred_check
          %p609 = pneg %p219
        $region70: #{tpu_custom_call.1} parent=67 // pred_check_branch
          %611 = sbr.rel (%p609) target = $region72
        $region71: #{tpu_custom_call.1} parent=67 // pred_region
          %s612 = sand.u32 %s204, 1
          %s613 = scalar_lea.sflag [#allocation6], %s612
          %s614 = sand.u32 %s204, 1
          %s615 = smul.addr %s614, 8
          %s616 = scalar_lea.vmem [#allocation9], %s615
          %617 = dma.done %s613, 128
        $region72: #{tpu_custom_call.1} parent=67 // pred_fallthru
          _
      $region68: #{tpu_custom_call.1} parent=5 // pred_fallthru
        _
    $region6: #{tpu_custom_call.1} parent=1 // loop_footer
      %s26 = sadd.s32 1, %s22
    $region7: #{tpu_custom_call.1} parent=1 // loop_footer_branch
      %21 = sbr.rel target = $region3
    $region8: #{tpu_custom_call.1} parent=1 // loop_exit
      _
    %618 = vsyncpa [#allocation5], 1
    %s619 = scalar_lea.sflag [#allocation5], 1
    %620 = vsyncpa %s619, 1
    %621 = vsyncpa [#allocation8], 1
    %s622 = scalar_lea.sflag [#allocation8], 1
    %623 = vsyncpa %s622, 1
    %624 = vsyncpa [#allocation6], 1
    %s625 = scalar_lea.sflag [#allocation6], 1
    %626 = vsyncpa %s625, 1

</llo_original>
